<compile_context>
chip_gen: v7x
topology: tpu7x:2x2x1
jax: 0.10.0
libtpu: 0.0.40
codegen_flags: <defaults>
</compile_context>

<pallas_src>
import functools

import jax
import jax.numpy as jnp
from jax.experimental import pallas as pl
from jax.experimental.pallas import tpu as pltpu

LANES = 128  # lane width of the packed parameter / activation slabs


def _round8(n):
    return (n + 7) & ~7


def make_layout(input_size, layer1, layer2):
    """Row offsets (multiples of 8) of each weight / the bias block inside the slab."""
    assert layer1 <= LANES and 2 * layer2 <= LANES
    assert input_size + layer2 <= LANES          # x | eps input slab
    assert input_size + 2 * layer2 <= LANES      # recon | mu | logvar output slab
    lay = {}
    r = 0
    lay["w1"] = (r, input_size, layer1)          # fc1:        [in, l1]
    r = _round8(r + input_size)
    lay["w2"] = (r, layer1, 2 * layer2)          # fc21|fc22:  [l1, 2*l2] (fused)
    r = _round8(r + layer1)
    lay["w3"] = (r, layer2, layer1)              # fc3:        [l2, l1]
    r = _round8(r + layer2)
    lay["w4"] = (r, layer1, input_size)          # fc4:        [l1, in]
    r = _round8(r + layer1)
    lay["bias"] = (r, 8, LANES)                  # bias rows (b1 / b21|b22 / b3 / b4)
    r = _round8(r + 8)
    lay["rows"] = r
    return lay


def pack_params(params, layout, input_size, layer1, layer2):
    """Pack 5 weights + 5 biases into ONE [rows, 128] f32 slab (single DMA).

    Kept in f32 (bias precision; the kernel casts weight slices to bf16 for the
    MXU, which is free VPU filler and keeps the DMA count at 1).
    """
    w = jnp.zeros((layout["rows"], LANES), jnp.float32)
    r0, rr, cc = layout["w1"]
    w = w.at[r0:r0 + rr, 0:cc].set(params["w1"])
    w2cat = jnp.concatenate([params["w21"], params["w22"]], axis=1)   # [l1, 2*l2]
    r0, rr, cc = layout["w2"]
    w = w.at[r0:r0 + rr, 0:cc].set(w2cat)
    r0, rr, cc = layout["w3"]
    w = w.at[r0:r0 + rr, 0:cc].set(params["w3"])
    r0, rr, cc = layout["w4"]
    w = w.at[r0:r0 + rr, 0:cc].set(params["w4"])

    b0 = layout["bias"][0]
    w = w.at[b0 + 0, 0:layer1].set(params["b1"][0])
    b2cat = jnp.concatenate([params["b21"], params["b22"]], axis=1)   # [1, 2*l2]
    w = w.at[b0 + 1, 0:2 * layer2].set(b2cat[0])
    w = w.at[b0 + 2, 0:layer1].set(params["b3"][0])
    w = w.at[b0 + 3, 0:input_size].set(params["b4"][0])
    return w


def vae_forward_kernel(in_ref, w_ref, out_ref, *, layout, dims):
    input_size, layer1, layer2 = dims

    def wslice_bf16(name):
        r0, rows, cols = layout[name]
        return w_ref[r0:r0 + rows, 0:cols].astype(jnp.bfloat16)   # static slice + cast

    b0 = layout["bias"][0]
    bias = w_ref[b0:b0 + 8, :]                       # [8, 128] f32 -> one vreg

    inp = in_ref[...]                                # [TB, 128]: x | eps | pad
    x = inp[:, 0:input_size]
    eps = inp[:, input_size:input_size + layer2]

    bf = jnp.bfloat16
    f32 = jnp.float32

    # ----- encode -----  (dropout = identity in eval mode)
    h1 = jnp.dot(x.astype(bf), wslice_bf16("w1"), preferred_element_type=f32)
    h1 = jnp.maximum(h1 + bias[0:1, 0:layer1], 0.0)              # ReLU, f32

    # fused mu|logvar projection: one MXU matmul, 2*layer2 lanes
    h2 = jnp.dot(h1.astype(bf), wslice_bf16("w2"), preferred_element_type=f32)
    h2 = h2 + bias[1:2, 0:2 * layer2]                            # [TB, 2*l2] = mu|logvar
    mu = h2[:, 0:layer2]
    logvar = h2[:, layer2:2 * layer2]

    # ----- reparametrize -----  (f32 VPU/EUP math)
    std = jnp.exp(logvar * 0.5)
    z = eps * std + mu

    # ----- decode -----  (dropout = identity in eval mode)
    h3 = jnp.dot(z.astype(bf), wslice_bf16("w3"), preferred_element_type=f32)
    h3 = jnp.maximum(h3 + bias[2:3, 0:layer1], 0.0)              # ReLU, f32
    recon = jnp.dot(h3.astype(bf), wslice_bf16("w4"), preferred_element_type=f32)
    recon = recon + bias[3:4, 0:input_size]

    # One lane-dense [TB, 128] output slab: recon | (mu|logvar already fused in h2) | pad.
    pad_w = out_ref.shape[1] - (input_size + 2 * layer2)
    pieces = [recon, h2]
    if pad_w > 0:
        pieces.append(jnp.zeros((recon.shape[0], pad_w), jnp.float32))
    out_ref[...] = jnp.concatenate(pieces, axis=-1)


def vae_forward(x, w_packed, eps, layout, *, input_size, layer1, layer2, tb=512):
    """Returns (reconstruction shaped like x, mu, logvar)."""
    x2d = x.reshape(-1, input_size)
    B = x2d.shape[0]

    # Batch tile (multiple of 8, capped at 512); pad B up to a multiple of it.
    TB = min(tb, _round8(B))
    n_blocks = -(-B // TB)
    Bp = n_blocks * TB

    # Pack x | eps | zero-pad into one lane-dense [Bp, 128] input slab (one DMA / tile).
    in_slab = jnp.zeros((Bp, LANES), jnp.float32)
    in_slab = in_slab.at[:B, 0:input_size].set(x2d)
    in_slab = in_slab.at[:B, input_size:input_size + layer2].set(eps)

    kernel = functools.partial(vae_forward_kernel, layout=layout,
                               dims=(input_size, layer1, layer2))

    flops = 2 * Bp * (input_size * layer1 + layer1 * 2 * layer2
                      + layer2 * layer1 + layer1 * input_size)
    bytes_accessed = (in_slab.size + Bp * LANES + w_packed.size) * 4

    out = pl.pallas_call(
        kernel,
        out_shape=jax.ShapeDtypeStruct((Bp, LANES), jnp.float32),
        grid=(n_blocks,),
        in_specs=[
            pl.BlockSpec((TB, LANES), lambda i: (i, 0)),                 # x|eps slab tile
            pl.BlockSpec((layout["rows"], LANES), lambda i: (0, 0)),     # params, VMEM-resident
        ],
        out_specs=pl.BlockSpec((TB, LANES), lambda i: (i, 0)),
        compiler_params=pltpu.CompilerParams(dimension_semantics=("parallel",)),
        cost_estimate=pl.CostEstimate(flops=flops,
                                      transcendentals=Bp * layer2,
                                      bytes_accessed=bytes_accessed),
    )(in_slab, w_packed)

    recon = out[:B, 0:input_size].reshape(x.shape)
    mu = out[:B, input_size:input_size + layer2]
    logvar = out[:B, input_size + layer2:input_size + 2 * layer2]
    return recon, mu, logvar


# ----------------------------- init (matches PyTorch) -----------------------------

def _xavier_uniform(key, fan_in, fan_out, gain):
    # nn.init.xavier_uniform_(weight, gain): U(-a, a), a = gain*sqrt(6/(fi+fo)).
    a = gain * jnp.sqrt(6.0 / (fan_in + fan_out))
    # PyTorch weight is [out, in]; we store transposed [in, out] for x @ W.
    return jax.random.uniform(key, (fan_in, fan_out), jnp.float32, -a, a)


def _linear_bias(key, fan_in, fan_out):
    # nn.Linear default bias init: U(-1/sqrt(fan_in), 1/sqrt(fan_in)); kept as [1, out].
    bound = 1.0 / jnp.sqrt(float(fan_in))
    return jax.random.uniform(key, (1, fan_out), jnp.float32, -bound, bound)


def init_params(key, input_size, layer1, layer2):
    gain = float(jnp.sqrt(2.0))
    keys = jax.random.split(key, 10)
    return {
        "w1": _xavier_uniform(keys[0], input_size, layer1, gain),
        "b1": _linear_bias(keys[1], input_size, layer1),
        "w21": _xavier_uniform(keys[2], layer1, layer2, gain),
        "b21": _linear_bias(keys[3], layer1, layer2),
        "w22": _xavier_uniform(keys[4], layer1, layer2, gain),
        "b22": _linear_bias(keys[5], layer1, layer2),
        "w3": _xavier_uniform(keys[6], layer2, layer1, gain),
        "b3": _linear_bias(keys[7], layer2, layer1),
        "w4": _xavier_uniform(keys[8], layer1, input_size, gain),
        "b4": _linear_bias(keys[9], layer1, input_size),
    }


# ----------------------------- pure-JAX references -----------------------------

def vae_ref_f32(x, params, eps):
    """Full-f32 reference (exact module math)."""
    input_size = params["w1"].shape[0]
    x2d = x.reshape(-1, input_size)
    h1 = jnp.maximum(x2d @ params["w1"] + params["b1"], 0.0)
    mu = h1 @ params["w21"] + params["b21"]
    logvar = h1 @ params["w22"] + params["b22"]
    z = eps * jnp.exp(logvar * 0.5) + mu
    h3 = jnp.maximum(z @ params["w3"] + params["b3"], 0.0)
    recon = h3 @ params["w4"] + params["b4"]
    return recon.reshape(x.shape), mu, logvar


def vae_ref_bf16(x, params, eps):
    """Reference mirroring the kernel's bf16-operand / f32-accumulate matmuls."""
    bf = lambda a: a.astype(jnp.bfloat16)
    dot = lambda a, b: jnp.dot(bf(a), bf(b), preferred_element_type=jnp.float32)
    input_size = params["w1"].shape[0]
    x2d = x.reshape(-1, input_size)
    h1 = jnp.maximum(dot(x2d, params["w1"]) + params["b1"], 0.0)
    mu = dot(h1, params["w21"]) + params["b21"]
    logvar = dot(h1, params["w22"]) + params["b22"]
    z = eps * jnp.exp(logvar * 0.5) + mu
    h3 = jnp.maximum(dot(z, params["w3"]) + params["b3"], 0.0)
    recon = dot(h3, params["w4"]) + params["b4"]
    return recon.reshape(x.shape), mu, logvar


if __name__ == "__main__":
    key = jax.random.PRNGKey(0)
    k_x, k_eps, k_p = jax.random.split(key, 3)

    input_size, layer1, layer2 = 32, 64, 16
    # x of shape [2, 4, 32] -> flattened to [8, 32] inside forward (x.view(-1, input_size)).
    x = jax.random.normal(k_x, (2, 4, input_size), jnp.float32)
    params = init_params(k_p, input_size, layer1, layer2)
    B = x.reshape(-1, input_size).shape[0]
    # eps ~ N(0, 1), deterministic stand-in for torch.FloatTensor(...).normal_()
    eps = jax.random.normal(k_eps, (B, layer2), jnp.float32)

    layout = make_layout(input_size, layer1, layer2)
    w_packed = pack_params(params, layout, input_size, layer1, layer2)

    recon, mu, logvar = vae_forward(
        x, w_packed, eps, layout,
        input_size=input_size, layer1=layer1, layer2=layer2)
    jax.block_until_ready((recon, mu, logvar))

    assert recon.shape == x.shape
    assert mu.shape == (B, layer2) and logvar.shape == (B, layer2)

    # Strict check against a reference with identical bf16-operand matmul math.
    r_b, mu_b, lv_b = vae_ref_bf16(x, params, eps)
    assert jnp.allclose(recon, r_b, rtol=5e-3, atol=5e-3)
    assert jnp.allclose(mu, mu_b, rtol=5e-3, atol=5e-3)
    assert jnp.allclose(logvar, lv_b, rtol=5e-3, atol=5e-3)

    # Loose sanity check against the full-f32 module math (bf16 quantization drift only).
    r_f, mu_f, lv_f = vae_ref_f32(x, params, eps)
    assert jnp.allclose(recon, r_f, rtol=1e-1, atol=1e-1)
    assert jnp.allclose(mu, mu_f, rtol=1e-1, atol=1e-1)
    assert jnp.allclose(logvar, lv_f, rtol=1e-1, atol=1e-1)

    print("KERNEL_OK")
</pallas_src>

<mosaic_0001>
module attributes {stable_mosaic.version = 11 : i64} {
  func.func @vae_forward_kernel(%arg0: i32, %arg1: memref<8x128xf32, #tpu.memory_space<vmem>>, %arg2: memref<184x128xf32, #tpu.memory_space<vmem>>, %arg3: memref<8x128xf32, #tpu.memory_space<vmem>>) attributes {dimension_semantics = [#tpu.dimension_semantics<parallel>], iteration_bounds = array<i64: 1>, scalar_prefetch = 0 : i64, scratch_operands = 0 : i64, tpu.core_type = #tpu.core_type<tc>, window_params = [{transform_indices = @transform_0, window_bounds = array<i64: 8, 128>}, {pipeline_mode = #tpu.pipeline_mode<synchronous>, transform_indices = @transform_1, window_bounds = array<i64: 184, 128>}, {transform_indices = @transform_2, window_bounds = array<i64: 8, 128>}]} {
    %c176 = arith.constant 176 : index
    %c0 = arith.constant 0 : index
    %0 = vector.load %arg2[%c176, %c0] : memref<184x128xf32, #tpu.memory_space<vmem>>, vector<8x128xf32>
    %c0_0 = arith.constant 0 : index
    %c0_1 = arith.constant 0 : index
    %1 = vector.load %arg1[%c0_0, %c0_1] : memref<8x128xf32, #tpu.memory_space<vmem>>, vector<8x128xf32>
    %2 = vector.extract_strided_slice %1 {offsets = [0, 0], sizes = [8, 32], strides = [1, 1]} : vector<8x128xf32> to vector<8x32xf32>
    %3 = vector.extract_strided_slice %1 {offsets = [0, 32], sizes = [8, 16], strides = [1, 1]} : vector<8x128xf32> to vector<8x16xf32>
    %4 = arith.truncf %2 : vector<8x32xf32> to vector<8x32xbf16>
    %c0_2 = arith.constant 0 : index
    %c0_3 = arith.constant 0 : index
    %5 = vector.load %arg2[%c0_2, %c0_3] : memref<184x128xf32, #tpu.memory_space<vmem>>, vector<32x64xf32>
    %6 = arith.truncf %5 : vector<32x64xf32> to vector<32x64xbf16>
    %cst = arith.constant dense<0.000000e+00> : vector<8x64xf32>
    %7 = tpu.matmul %4, %6, %cst {dimension_numbers = #tpu.dot_dimension_numbers<[1], [0], [0], [1], [0, 0, 1, 1], [], []>} : vector<8x32xbf16>, vector<32x64xbf16>, vector<8x64xf32> -> vector<8x64xf32>
    %8 = vector.extract_strided_slice %0 {offsets = [0, 0], sizes = [1, 64], strides = [1, 1]} : vector<8x128xf32> to vector<1x64xf32>
    %9 = vector.broadcast %8 : vector<1x64xf32> to vector<8x64xf32>
    %10 = arith.addf %7, %9 : vector<8x64xf32>
    %cst_4 = arith.constant 0.000000e+00 : f32
    %11 = vector.broadcast %cst_4 : f32 to vector<8x64xf32>
    %12 = arith.maximumf %10, %11 : vector<8x64xf32>
    %13 = arith.truncf %12 : vector<8x64xf32> to vector<8x64xbf16>
    %c32 = arith.constant 32 : index
    %c0_5 = arith.constant 0 : index
    %14 = vector.load %arg2[%c32, %c0_5] : memref<184x128xf32, #tpu.memory_space<vmem>>, vector<64x32xf32>
    %15 = arith.truncf %14 : vector<64x32xf32> to vector<64x32xbf16>
    %cst_6 = arith.constant dense<0.000000e+00> : vector<8x32xf32>
    %16 = tpu.matmul %13, %15, %cst_6 {dimension_numbers = #tpu.dot_dimension_numbers<[1], [0], [0], [1], [0, 0, 1, 1], [], []>} : vector<8x64xbf16>, vector<64x32xbf16>, vector<8x32xf32> -> vector<8x32xf32>
    %17 = vector.extract_strided_slice %0 {offsets = [1, 0], sizes = [1, 32], strides = [1, 1]} : vector<8x128xf32> to vector<1x32xf32>
    %18 = vector.broadcast %17 : vector<1x32xf32> to vector<8x32xf32>
    %19 = arith.addf %16, %18 : vector<8x32xf32>
    %20 = vector.extract_strided_slice %19 {offsets = [0, 0], sizes = [8, 16], strides = [1, 1]} : vector<8x32xf32> to vector<8x16xf32>
    %21 = vector.extract_strided_slice %19 {offsets = [0, 16], sizes = [8, 16], strides = [1, 1]} : vector<8x32xf32> to vector<8x16xf32>
    %cst_7 = arith.constant 5.000000e-01 : f32
    %22 = vector.broadcast %cst_7 : f32 to vector<8x16xf32>
    %23 = arith.mulf %21, %22 : vector<8x16xf32>
    %24 = math.exp %23 : vector<8x16xf32>
    %25 = arith.mulf %3, %24 : vector<8x16xf32>
    %26 = arith.addf %25, %20 : vector<8x16xf32>
    %27 = arith.truncf %26 : vector<8x16xf32> to vector<8x16xbf16>
    %c96 = arith.constant 96 : index
    %c0_8 = arith.constant 0 : index
    %28 = vector.load %arg2[%c96, %c0_8] : memref<184x128xf32, #tpu.memory_space<vmem>>, vector<16x64xf32>
    %29 = arith.truncf %28 : vector<16x64xf32> to vector<16x64xbf16>
    %cst_9 = arith.constant dense<0.000000e+00> : vector<8x64xf32>
    %30 = tpu.matmul %27, %29, %cst_9 {dimension_numbers = #tpu.dot_dimension_numbers<[1], [0], [0], [1], [0, 0, 1, 1], [], []>} : vector<8x16xbf16>, vector<16x64xbf16>, vector<8x64xf32> -> vector<8x64xf32>
    %31 = vector.extract_strided_slice %0 {offsets = [2, 0], sizes = [1, 64], strides = [1, 1]} : vector<8x128xf32> to vector<1x64xf32>
    %32 = vector.broadcast %31 : vector<1x64xf32> to vector<8x64xf32>
    %33 = arith.addf %30, %32 : vector<8x64xf32>
    %cst_10 = arith.constant 0.000000e+00 : f32
    %34 = vector.broadcast %cst_10 : f32 to vector<8x64xf32>
    %35 = arith.maximumf %33, %34 : vector<8x64xf32>
    %36 = arith.truncf %35 : vector<8x64xf32> to vector<8x64xbf16>
    %c112 = arith.constant 112 : index
    %c0_11 = arith.constant 0 : index
    %37 = vector.load %arg2[%c112, %c0_11] : memref<184x128xf32, #tpu.memory_space<vmem>>, vector<64x32xf32>
    %38 = arith.truncf %37 : vector<64x32xf32> to vector<64x32xbf16>
    %cst_12 = arith.constant dense<0.000000e+00> : vector<8x32xf32>
    %39 = tpu.matmul %36, %38, %cst_12 {dimension_numbers = #tpu.dot_dimension_numbers<[1], [0], [0], [1], [0, 0, 1, 1], [], []>} : vector<8x64xbf16>, vector<64x32xbf16>, vector<8x32xf32> -> vector<8x32xf32>
    %40 = vector.extract_strided_slice %0 {offsets = [3, 0], sizes = [1, 32], strides = [1, 1]} : vector<8x128xf32> to vector<1x32xf32>
    %41 = vector.broadcast %40 : vector<1x32xf32> to vector<8x32xf32>
    %42 = arith.addf %39, %41 : vector<8x32xf32>
    %cst_13 = arith.constant 0.000000e+00 : f32
    %43 = vector.broadcast %cst_13 : f32 to vector<8x64xf32>
    %44 = tpu.concatenate %42, %19, %43 in 1 : vector<8x32xf32>, vector<8x32xf32>, vector<8x64xf32> -> vector<8x128xf32>
    %c0_14 = arith.constant 0 : index
    %c0_15 = arith.constant 0 : index
    %45 = vector.load %arg3[%c0_14, %c0_15] : memref<8x128xf32, #tpu.memory_space<vmem>>, vector<8x128xf32>
    tpu.vector_store %arg3[%c0_14, %c0_15], %44 {strides = array<i32>} : memref<8x128xf32, #tpu.memory_space<vmem>>, vector<8x128xf32>,
    return
  }
  func.func @transform_0(%arg0: i32) -> (i32, i32) {
    %c0_i32 = arith.constant 0 : i32
    %c0_i32_0 = arith.constant 0 : i32
    return %arg0, %c0_i32 : i32, i32
  }
  func.func @transform_1(%arg0: i32) -> (i32, i32) {
    %c0_i32 = arith.constant 0 : i32
    %c0_i32_0 = arith.constant 0 : i32
    %c0_i32_1 = arith.constant 0 : i32
    return %c0_i32, %c0_i32_0 : i32, i32
  }
  func.func @transform_2(%arg0: i32) -> (i32, i32) {
    %c0_i32 = arith.constant 0 : i32
    %c0_i32_0 = arith.constant 0 : i32
    return %arg0, %c0_i32 : i32, i32
  }
}

</mosaic_0001>

<llo_original>
// kernel: tpu_custom_call.1
$region0: #{tpu_custom_call.1}
  #allocation0 [shape = 'u32[]', space=smem, size = 0x4, offset = 0x4, fixed_abs, tag = 'smem constant byte address 0x4 - core index']
  #allocation1 [shape = 'u32[144,128]{1,0:T(1,128)}', space=vmem, size = 0x12000, scoped, tag = 'internal scratch']
  %s0 = inlined_call_operand.hbm [shape: f32[8,128], index: 0, kind: input, shape index: {}]
  %s1 = inlined_call_operand.hbm [shape: f32[184,128], index: 1, kind: input, shape index: {}]
  %s2 = inlined_call_operand.hbm [shape: f32[8,128], index: 2, kind: output, shape index: {}]
  %s3 = sld [smem:[#allocation0]]
  $region26: #{tpu_custom_call.1} parent=0
    _
  %s5 = ssub.s32 1, %s3
  %s6 = scalar_select 0, %s5, %s3
  $region1: #{tpu_custom_call.1} parent=0
    #allocation2 [shape = 'u8[4096]{0}', space=vmem, size = 0x1000, scoped, tag = 'input window, operand 0, single buffered']
    #allocation3 [shape = 's32[1]{0}', space=sflag, size = 0x4, scoped, tag = 'scoped memory for tpu_custom_call.1']
    #allocation4 [shape = 's32[1]{0}', space=sflag, size = 0x4, scoped, tag = 'scoped memory for tpu_custom_call.1']
    #allocation5 [shape = 'u8[94208]{0}', space=vmem, size = 0x17000, scoped, tag = 'input window, operand 1, single buffered']
    #allocation6 [shape = 's32[1]{0}', space=sflag, size = 0x4, scoped, tag = 'scoped memory for tpu_custom_call.1']
    #allocation7 [shape = 'u8[4096]{0}', space=vmem, size = 0x1000, scoped, tag = 'output window, operand 0, single buffered']
    %7 = vsyncpa [#allocation3], 0
    %8 = vsyncpa [#allocation6], 0
    %9 = vsyncpa [#allocation4], 0
    // Predicated region
    $region2: #{tpu_custom_call.1} parent=1 // pred_check
      _
    $region3: #{tpu_custom_call.1} parent=1 // pred_check_branch
      %11 = sbr.rel (0) target = $region5
    $region4: #{tpu_custom_call.1} parent=1 // pred_region
      %s13 = ssub.s32 128, 128
      %14 = vsyncadd [#allocation3], %s13
      %s16 = sshll.u32 [#allocation2], 4
      %s17 = int_to_ptr.vmem [resolvable:$true] %s16
      %19 = dma.hbm_to_vmem [thread:$0]  %s0, 128, %s17, [#allocation3]
    $region5: #{tpu_custom_call.1} parent=1 // pred_fallthru
      _
    // Predicated region
    $region6: #{tpu_custom_call.1} parent=1 // pred_check
      _
    $region7: #{tpu_custom_call.1} parent=1 // pred_check_branch
      %21 = sbr.rel (0) target = $region9
    $region8: #{tpu_custom_call.1} parent=1 // pred_region
      %s23 = ssub.s32 2944, 2944
      %24 = vsyncadd [#allocation6], %s23
      %s25 = sshll.u32 [#allocation5], 4
      %s26 = int_to_ptr.vmem [resolvable:$true] %s25
      %31 = dma.hbm_to_vmem [thread:$0]  %s1, 2944, %s26, [#allocation6], 128, 128, 8
    $region9: #{tpu_custom_call.1} parent=1 // pred_fallthru
      _
    // Predicated region
    $region10: #{tpu_custom_call.1} parent=1 // pred_check
      _
    $region11: #{tpu_custom_call.1} parent=1 // pred_check_branch
      %33 = sbr.rel (0) target = $region13
    $region12: #{tpu_custom_call.1} parent=1 // pred_region
      %34 = dma.done [#allocation3], 128
    $region13: #{tpu_custom_call.1} parent=1 // pred_fallthru
      _
    // Predicated region
    $region14: #{tpu_custom_call.1} parent=1 // pred_check
      _
    $region15: #{tpu_custom_call.1} parent=1 // pred_check_branch
      %36 = sbr.rel (0) target = $region17
    $region16: #{tpu_custom_call.1} parent=1 // pred_region
      %37 = dma.done [#allocation6], 2944
    $region17: #{tpu_custom_call.1} parent=1 // pred_fallthru
      _
    %v39 = vld [vmem:[#allocation5 + $0xb0] sm:$0xff]
    %v40 = vld [vmem:[#allocation2] sm:$0xff]
    %v41 = vpack.c.bf16 %v40, %v40
    %v42 = vld [vmem:[#allocation5] sm:$0xff]
    %v43 = vld [vmem:[#allocation5 + $0x8] sm:$0xff]
    %v44 = vld [vmem:[#allocation5 + $0x10] sm:$0xff]
    %v45 = vld [vmem:[#allocation5 + $0x18] sm:$0xff]
    %v46 = vpack.c.bf16 %v43, %v42
    %v47 = vpack.c.bf16 %v45, %v44
    %v48 = vlaneseq
    %v49 = vshrl.u32 %v48, 7
    %v50 = vsub.s32 0, %v49
    %v51 = vrot.slane %v39, %v50
    %vm52 = vcmask 261120
    %v54 = vsel %vm52, %v41, 0
    %56 = vmatprep.subr.bf16.mxu0 0
    %57 = vmatpush1.bf16.msra.mxu0 %v46
    %58 = vmatprep.subr.bf16.mxu0 0
    %59 = vmatpush1.bf16.msra.mxu0 %v47
    %60 = vmatprep.subr.bf16.mxu0 0
    %61 = vmatpush1.bf16.msra.mxu0 0
    %62 = vmatprep.subr.bf16.mxu0 0
    %63 = vmatpush1.bf16.msra.mxu0 0
    %64 = vmatprep.subr.bf16.mxu0 0
    %65 = vmatpush1.bf16.msra.mxu0 0
    %66 = vmatprep.subr.bf16.mxu0 0
    %67 = vmatpush1.bf16.msra.mxu0 0
    %68 = vmatprep.subr.bf16.mxu0 0
    %69 = vmatpush1.bf16.msra.mxu0 0
    %70 = vmatprep.subr.bf16.mxu0 0
    %71 = vmatpush1.bf16.msra.mxu0 0
    %72 = vmatprep.subr.bf16.mxu0 0
    %73 = vmatpush1.bf16.msra.mxu0 0
    %74 = vmatprep.subr.bf16.mxu0 0
    %75 = vmatpush1.bf16.msra.mxu0 0
    %76 = vmatprep.subr.bf16.mxu0 0
    %77 = vmatpush1.bf16.msra.mxu0 0
    %78 = vmatprep.subr.bf16.mxu0 0
    %79 = vmatpush1.bf16.msra.mxu0 0
    %80 = vmatprep.subr.bf16.mxu0 0
    %81 = vmatpush1.bf16.msra.mxu0 0
    %82 = vmatprep.subr.bf16.mxu0 0
    %83 = vmatpush1.bf16.msra.mxu0 0
    %84 = vmatprep.subr.bf16.mxu0 0
    %85 = vmatpush1.bf16.msra.mxu0 0
    %86 = vmatprep.subr.bf16.mxu0 0
    %87 = vmatpush1.bf16.msra.mxu0 0
    %88 = vmatprep.mubr.bf16.mxu0 0
    %89 = vmatmul.mubr.bf16.gmra.mrb[0].mxu0 %v54
    %v90 = vpop.f32.mrb[0].mxu0
    %v91 = vadd.f32 %v51, %v90
    %v92 = vpop.f32.mrb[0].mxu0
    %v93 = vpop.f32.mrb[0].mxu0
    %v94 = vpop.f32.mrb[0].mxu0
    %95 = vdwg.mxu0
    %v96 = vmax.f32 %v91, 0.0
    %v97 = vpack.c.bf16 %v96, %v96
    %v98 = vld [vmem:[#allocation5 + $0x20] sm:$0xff]
    %v99 = vld [vmem:[#allocation5 + $0x28] sm:$0xff]
    %v100 = vld [vmem:[#allocation5 + $0x30] sm:$0xff]
    %v101 = vld [vmem:[#allocation5 + $0x38] sm:$0xff]
    %v102 = vld [vmem:[#allocation5 + $0x40] sm:$0xff]
    %v103 = vld [vmem:[#allocation5 + $0x48] sm:$0xff]
    %v104 = vld [vmem:[#allocation5 + $0x50] sm:$0xff]
    %v105 = vld [vmem:[#allocation5 + $0x58] sm:$0xff]
    %v106 = vpack.c.bf16 %v99, %v98
    %v107 = vpack.c.bf16 %v101, %v100
    %v108 = vpack.c.bf16 %v103, %v102
    %v109 = vpack.c.bf16 %v105, %v104
    %v110 = vlaneseq
    %v111 = vshrl.u32 %v110, 7
    %v112 = vsub.s32 1, %v111
    %v113 = vrot.slane %v39, %v112
    %vm114 = vcmask 523264
    %v116 = vsel %vm114, %v97, 0
    %118 = vmatprep.subr.bf16.mxu0 0
    %119 = vmatpush1.bf16.msra.mxu0 %v106
    %120 = vmatprep.subr.bf16.mxu0 0
    %121 = vmatpush1.bf16.msra.mxu0 %v107
    %122 = vmatprep.subr.bf16.mxu0 0
    %123 = vmatpush1.bf16.msra.mxu0 %v108
    %124 = vmatprep.subr.bf16.mxu0 0
    %125 = vmatpush1.bf16.msra.mxu0 %v109
    %126 = vmatprep.subr.bf16.mxu0 0
    %127 = vmatpush1.bf16.msra.mxu0 0
    %128 = vmatprep.subr.bf16.mxu0 0
    %129 = vmatpush1.bf16.msra.mxu0 0
    %130 = vmatprep.subr.bf16.mxu0 0
    %131 = vmatpush1.bf16.msra.mxu0 0
    %132 = vmatprep.subr.bf16.mxu0 0
    %133 = vmatpush1.bf16.msra.mxu0 0
    %134 = vmatprep.subr.bf16.mxu0 0
    %135 = vmatpush1.bf16.msra.mxu0 0
    %136 = vmatprep.subr.bf16.mxu0 0
    %137 = vmatpush1.bf16.msra.mxu0 0
    %138 = vmatprep.subr.bf16.mxu0 0
    %139 = vmatpush1.bf16.msra.mxu0 0
    %140 = vmatprep.subr.bf16.mxu0 0
    %141 = vmatpush1.bf16.msra.mxu0 0
    %142 = vmatprep.subr.bf16.mxu0 0
    %143 = vmatpush1.bf16.msra.mxu0 0
    %144 = vmatprep.subr.bf16.mxu0 0
    %145 = vmatpush1.bf16.msra.mxu0 0
    %146 = vmatprep.subr.bf16.mxu0 0
    %147 = vmatpush1.bf16.msra.mxu0 0
    %148 = vmatprep.subr.bf16.mxu0 0
    %149 = vmatpush1.bf16.msra.mxu0 0
    %150 = vmatprep.mubr.bf16.mxu0 0
    %151 = vmatmul.mubr.bf16.gmra.mrb[0].mxu0 %v116
    %v152 = vpop.f32.mrb[0].mxu0
    %v153 = vadd.f32 %v113, %v152
    %v154 = vpop.f32.mrb[0].mxu0
    %v155 = vpop.f32.mrb[0].mxu0
    %v156 = vpop.f32.mrb[0].mxu0
    %157 = vdwg.mxu0
    %v158 = vmul.f32 %v153, 0.5
    %v159 = vmul.f32 %v158, 1.442695
    %v160 = vpow.pop %v159
    %162 = vrot.lane.b32.xlu0 %v160, 16
    %v163 = vpop.permute.xlu0 %162
    %v165 = vmul.f32 %v40, %v163
    %167 = vrot.lane.b32.xlu0 %v153, 32
    %v168 = vpop.permute.xlu0 %167
    %v170 = vadd.f32 %v165, %v168
    %v171 = vpack.c.bf16 %v170, %v170
    %v172 = vld [vmem:[#allocation5 + $0x60] sm:$0xff]
    %v173 = vld [vmem:[#allocation5 + $0x68] sm:$0xff]
    %v174 = vpack.c.bf16 %v173, %v172
    %v175 = vlaneseq
    %v176 = vshrl.u32 %v175, 7
    %v177 = vsub.s32 2, %v176
    %v178 = vrot.slane %v39, %v177
    %180 = vrot.lane.b32.xlu0 %v171, 96
    %v181 = vpop.permute.xlu0 %180
    %vm182 = vcmask 130048
    %v184 = vsel %vm182, %v181, 0
    %186 = vmatprep.subr.bf16.mxu0 0
    %187 = vmatpush1.bf16.msra.mxu0 %v174
    %188 = vmatprep.subr.bf16.mxu0 0
    %189 = vmatpush1.bf16.msra.mxu0 0
    %190 = vmatprep.subr.bf16.mxu0 0
    %191 = vmatpush1.bf16.msra.mxu0 0
    %192 = vmatprep.subr.bf16.mxu0 0
    %193 = vmatpush1.bf16.msra.mxu0 0
    %194 = vmatprep.subr.bf16.mxu0 0
    %195 = vmatpush1.bf16.msra.mxu0 0
    %196 = vmatprep.subr.bf16.mxu0 0
    %197 = vmatpush1.bf16.msra.mxu0 0
    %198 = vmatprep.subr.bf16.mxu0 0
    %199 = vmatpush1.bf16.msra.mxu0 0
    %200 = vmatprep.subr.bf16.mxu0 0
    %201 = vmatpush1.bf16.msra.mxu0 0
    %202 = vmatprep.subr.bf16.mxu0 0
    %203 = vmatpush1.bf16.msra.mxu0 0
    %204 = vmatprep.subr.bf16.mxu0 0
    %205 = vmatpush1.bf16.msra.mxu0 0
    %206 = vmatprep.subr.bf16.mxu0 0
    %207 = vmatpush1.bf16.msra.mxu0 0
    %208 = vmatprep.subr.bf16.mxu0 0
    %209 = vmatpush1.bf16.msra.mxu0 0
    %210 = vmatprep.subr.bf16.mxu0 0
    %211 = vmatpush1.bf16.msra.mxu0 0
    %212 = vmatprep.subr.bf16.mxu0 0
    %213 = vmatpush1.bf16.msra.mxu0 0
    %214 = vmatprep.subr.bf16.mxu0 0
    %215 = vmatpush1.bf16.msra.mxu0 0
    %216 = vmatprep.subr.bf16.mxu0 0
    %217 = vmatpush1.bf16.msra.mxu0 0
    %218 = vmatprep.mubr.bf16.mxu0 0
    %219 = vmatmul.mubr.bf16.gmra.mrb[0].mxu0 %v184
    %v220 = vpop.f32.mrb[0].mxu0
    %v221 = vadd.f32 %v178, %v220
    %v222 = vpop.f32.mrb[0].mxu0
    %v223 = vpop.f32.mrb[0].mxu0
    %v224 = vpop.f32.mrb[0].mxu0
    %225 = vdwg.mxu0
    %v226 = vmax.f32 %v221, 0.0
    %v227 = vpack.c.bf16 %v226, %v226
    %v228 = vld [vmem:[#allocation5 + $0x70] sm:$0xff]
    %v229 = vld [vmem:[#allocation5 + $0x78] sm:$0xff]
    %v230 = vld [vmem:[#allocation5 + $0x80] sm:$0xff]
    %v231 = vld [vmem:[#allocation5 + $0x88] sm:$0xff]
    %v232 = vld [vmem:[#allocation5 + $0x90] sm:$0xff]
    %v233 = vld [vmem:[#allocation5 + $0x98] sm:$0xff]
    %v234 = vld [vmem:[#allocation5 + $0xa0] sm:$0xff]
    %v235 = vld [vmem:[#allocation5 + $0xa8] sm:$0xff]
    %v236 = vpack.c.bf16 %v229, %v228
    %v237 = vpack.c.bf16 %v231, %v230
    %v238 = vpack.c.bf16 %v233, %v232
    %v239 = vpack.c.bf16 %v235, %v234
    %v240 = vlaneseq
    %v241 = vshrl.u32 %v240, 7
    %v242 = vsub.s32 3, %v241
    %v243 = vrot.slane %v39, %v242
    %v245 = vsel %vm114, %v227, 0
    %247 = vmatprep.subr.bf16.mxu0 0
    %248 = vmatpush1.bf16.msra.mxu0 %v236
    %249 = vmatprep.subr.bf16.mxu0 0
    %250 = vmatpush1.bf16.msra.mxu0 %v237
    %251 = vmatprep.subr.bf16.mxu0 0
    %252 = vmatpush1.bf16.msra.mxu0 %v238
    %253 = vmatprep.subr.bf16.mxu0 0
    %254 = vmatpush1.bf16.msra.mxu0 %v239
    %255 = vmatprep.subr.bf16.mxu0 0
    %256 = vmatpush1.bf16.msra.mxu0 0
    %257 = vmatprep.subr.bf16.mxu0 0
    %258 = vmatpush1.bf16.msra.mxu0 0
    %259 = vmatprep.subr.bf16.mxu0 0
    %260 = vmatpush1.bf16.msra.mxu0 0
    %261 = vmatprep.subr.bf16.mxu0 0
    %262 = vmatpush1.bf16.msra.mxu0 0
    %263 = vmatprep.subr.bf16.mxu0 0
    %264 = vmatpush1.bf16.msra.mxu0 0
    %265 = vmatprep.subr.bf16.mxu0 0
    %266 = vmatpush1.bf16.msra.mxu0 0
    %267 = vmatprep.subr.bf16.mxu0 0
    %268 = vmatpush1.bf16.msra.mxu0 0
    %269 = vmatprep.subr.bf16.mxu0 0
    %270 = vmatpush1.bf16.msra.mxu0 0
    %271 = vmatprep.subr.bf16.mxu0 0
    %272 = vmatpush1.bf16.msra.mxu0 0
    %273 = vmatprep.subr.bf16.mxu0 0
    %274 = vmatpush1.bf16.msra.mxu0 0
    %275 = vmatprep.subr.bf16.mxu0 0
    %276 = vmatpush1.bf16.msra.mxu0 0
    %277 = vmatprep.subr.bf16.mxu0 0
    %278 = vmatpush1.bf16.msra.mxu0 0
    %279 = vmatprep.mubr.bf16.mxu0 0
    %280 = vmatmul.mubr.bf16.gmra.mrb[0].mxu0 %v245
    %v281 = vpop.f32.mrb[0].mxu0
    %v282 = vadd.f32 %v243, %v281
    %v283 = vpop.f32.mrb[0].mxu0
    %v284 = vpop.f32.mrb[0].mxu0
    %v285 = vpop.f32.mrb[0].mxu0
    %286 = vdwg.mxu0
    %v287 = vsel %vm52, %v282, %v168
    %v288 = vsel %vm114, %v287, 0.0
    %289 = vst [vmem:[#allocation7] sm:$0xff] %v288
    // Predicated region
    $region18: #{tpu_custom_call.1} parent=1 // pred_check
      _
    $region19: #{tpu_custom_call.1} parent=1 // pred_check_branch
      %291 = sbr.rel (0) target = $region21
    $region20: #{tpu_custom_call.1} parent=1 // pred_region
      %s293 = ssub.s32 128, 128
      %294 = vsyncadd [#allocation4], %s293
      %s296 = sshll.u32 [#allocation7], 4
      %s297 = int_to_ptr.vmem [resolvable:$true] %s296
      %299 = dma.vmem_to_hbm [thread:$0]  %s297, 128, %s2, [#allocation4]
    $region21: #{tpu_custom_call.1} parent=1 // pred_fallthru
      _
    // Predicated region
    $region22: #{tpu_custom_call.1} parent=1 // pred_check
      _
    $region23: #{tpu_custom_call.1} parent=1 // pred_check_branch
      %301 = sbr.rel (0) target = $region25
    $region24: #{tpu_custom_call.1} parent=1 // pred_region
      %302 = dma.done [#allocation4], 128
    $region25: #{tpu_custom_call.1} parent=1 // pred_fallthru
      _
    %303 = vsyncpa [#allocation3], 1
    %304 = vsyncpa [#allocation6], 1
    %305 = vsyncpa [#allocation4], 1

</llo_original>
